<compile_context>
chip_gen: v7x
topology: tpu7x:2x2x1
jax: 0.10.0
libtpu: 0.0.40
codegen_flags: <defaults>
</compile_context>

<pallas_src>
from typing import List

import jax
import jax.numpy as jnp
from jax import lax
from jax.experimental import pallas as pl
from jax.experimental.pallas import tpu as pltpu


# ---------------------------------------------------------------------------
# VMEM-aware tiling helpers
# ---------------------------------------------------------------------------
def _vmem_limit_bytes() -> int:
    """~75% of this generation's physical VMEM (48 MiB v7x, 96 MiB v5e/v6e)."""
    cap = 64 * 1024 * 1024            # conservative default: v7x per-TensorCore
    try:
        info = pltpu.get_tpu_info()
        cap = int(getattr(info, "vmem_capacity_bytes", cap)) or cap
    except Exception:
        pass
    return max(16 * 1024 * 1024, (cap * 3) // 4)


def _per_graph_vmem_bytes(n: int, fin0: int, blk: dict) -> int:
    """Rough VMEM footprint of one graph in the fused block kernel."""
    widths = [blk["wcat"].shape[1], blk["c"], fin0] + [w.shape[1] for w, _ in blk["rest"]]
    max_w = max(widths)
    in_bytes = 2 * (n * n * 2 + n * fin0 * 4)          # double-buffered inputs (adj bf16, x <= f32)
    out_bytes = 2 * (blk["c"] * blk["fout_last"] * 2 + blk["c"] * blk["c"] * 2)
    interm = 6 * n * max_w * 4                          # f32 temporaries (z, h, exp, s, ...)
    return in_bytes + out_bytes + interm


def _choose_graphs_per_step(batch: int, per_graph_bytes: int, vmem_budget: int) -> int:
    """Largest bb that fits the VMEM budget, divides the batch, and (when
    possible) leaves an even number of grid steps for v7x megacore splitting."""
    if batch <= 1:
        return 1
    bb = max(1, min(batch, vmem_budget // max(per_graph_bytes, 1)))
    while batch % bb:
        bb -= 1
    for cand in range(bb, 0, -1):               # prefer an even, >= 2 step grid
        if batch % cand == 0 and (batch // cand) % 2 == 0:
            return cand
    return bb


# ---------------------------------------------------------------------------
# Shared numerical recipe (used by BOTH the Pallas kernel and the reference,
# so they match bit-for-bit up to summation order).
# ---------------------------------------------------------------------------
def _pool_block_math(x_in, adj, mask, wcat, bcat, conv_ws, conv_bs, fout0, c):
    """One pool block. x_in: (b,N,Fin) f32/bf16, adj: (b,N,N) bf16, mask: (b,N,1) bf16.
    wcat = [W0 | Ws] (Fin, Fout0+C), bcat = [b0 | bs]."""
    bf16 = jnp.bfloat16

    def feat_mm(x, w):              # (b*N, Fin) @ (Fin, Fout): bf16 MXU, f32 acc
        b, n, fin = x.shape
        fout = w.shape[1]
        y = jnp.dot(x.reshape(b * n, fin).astype(bf16), w.astype(bf16),
                    preferred_element_type=jnp.float32)
        return y.reshape(b, n, fout)

    def adj_mm(a, x):               # batched (N,N) @ (N,F): bf16 MXU, f32 acc
        return jnp.einsum('bnm,bmf->bnf', a, x.astype(bf16),
                          preferred_element_type=jnp.float32)

    fin0, fcat = wcat.shape
    # ---- fused conv-0 + assignment: ONE N x N MXU pass over x_in ----
    if fcat <= fin0:                # contract the N x N matmul against min width
        z = adj_mm(adj, feat_mm(x_in, wcat))
    else:
        z = feat_mm(adj_mm(adj, x_in), wcat)
    z = z + bcat.reshape(1, 1, fcat).astype(jnp.float32)
    h0, logits = z[..., :fout0], z[..., fout0:]

    # ---- embedding GNN (remaining conv layers), activations carried in bf16 ----
    x_emb = jnp.maximum(h0, 0.0).astype(bf16) * mask
    for w, b in zip(conv_ws, conv_bs):
        fin, fout = w.shape
        if fout <= fin:
            h = adj_mm(adj, feat_mm(x_emb, w))
        else:
            h = feat_mm(adj_mm(adj, x_emb), w)
        h = h + b.reshape(1, 1, fout).astype(jnp.float32)
        x_emb = jnp.maximum(h, 0.0).astype(bf16) * mask

    # ---- soft assignment: S = softmax(logits) * mask (exact reciprocal) ----
    logits = logits - jnp.max(logits, axis=-1, keepdims=True)
    e = jnp.exp(logits)
    s = (e / jnp.sum(e, axis=-1, keepdims=True)).astype(bf16) * mask

    # ---- pooling: transposes folded into the dot_general contraction dims ----
    x_new = jnp.einsum('bnc,bnf->bcf', s, x_emb, preferred_element_type=jnp.float32)
    sa = jnp.einsum('bnc,bnm->bcm', s, adj, preferred_element_type=jnp.float32)
    adj_new = jnp.einsum('bcm,bmk->bck', sa.astype(bf16), s,
                         preferred_element_type=jnp.float32)
    return x_new.astype(bf16), adj_new.astype(bf16)


def _final_merge(x):
    """set_final_merge_layer equivalent: masked mean over nodes (all clusters
    valid after pooling)."""
    xf = x.astype(jnp.float32)
    return jnp.sum(xf, axis=1) / xf.shape[1]


# ---------------------------------------------------------------------------
# Fused pool-block Pallas kernel (conv stack + DiffPool) for `bb` graphs/step
# ---------------------------------------------------------------------------
def _make_pool_block_kernel(bb, n_nodes, fout0, c, num_rest):
    bf16 = jnp.bfloat16

    def kernel(nc_ref, x_ref, adj_ref, wcat_ref, bcat_ref, *rest):
        conv_refs = rest[: 2 * num_rest]
        xo_ref = rest[2 * num_rest]
        ao_ref = rest[2 * num_rest + 1]

        i = pl.program_id(0)

        # Node-validity mask from scalar-prefetched per-graph node counts:
        # single iota + small select chain (no concat / per-graph broadcasts).
        row = lax.broadcasted_iota(jnp.int32, (bb, n_nodes, 1), 1)
        if bb == 1:
            limit = nc_ref[i]
        else:
            gidx = lax.broadcasted_iota(jnp.int32, (bb, n_nodes, 1), 0)
            limit = jnp.zeros((bb, n_nodes, 1), jnp.int32)
            for g in range(bb):
                limit = jnp.where(gidx == g, nc_ref[i * bb + g], limit)
        mask = (row < limit).astype(bf16)

        adj = adj_ref[...].astype(bf16)          # (bb, N, N)
        x_in = x_ref[...]                        # (bb, N, Fin0) f32 or bf16
        conv_ws = [conv_refs[2 * l][...] for l in range(num_rest)]
        conv_bs = [conv_refs[2 * l + 1][...] for l in range(num_rest)]

        x_new, adj_new = _pool_block_math(x_in, adj, mask, wcat_ref[...], bcat_ref[...],
                                          conv_ws, conv_bs, fout0, c)
        xo_ref[...] = x_new.astype(xo_ref.dtype)
        ao_ref[...] = adj_new.astype(ao_ref.dtype)

    return kernel


def fused_pool_block(x, adj, node_counts, blk, *, bb, vmem_limit):
    """One pool block (fused conv stack + DiffPool) as a single pallas_call."""
    B, N, fin0 = x.shape
    c, fout0, fout_last = blk["c"], blk["fout0"], blk["fout_last"]
    rest = blk["rest"]
    num_rest = len(rest)

    kernel = _make_pool_block_kernel(bb, N, fout0, c, num_rest)

    weight_inputs = [blk["wcat"], blk["bcat"]]
    weight_specs = [pl.BlockSpec(blk["wcat"].shape, lambda i, nc: (0, 0)),
                    pl.BlockSpec(blk["bcat"].shape, lambda i, nc: (0, 0))]
    for w, b in rest:
        weight_inputs += [w, b]
        weight_specs += [pl.BlockSpec(w.shape, lambda i, nc: (0, 0)),
                         pl.BlockSpec(b.shape, lambda i, nc: (0, 0))]

    x_new, adj_new = pl.pallas_call(
        kernel,
        out_shape=(
            jax.ShapeDtypeStruct((B, c, fout_last), jnp.bfloat16),   # bf16 writeback
            jax.ShapeDtypeStruct((B, c, c), jnp.bfloat16),
        ),
        grid_spec=pltpu.PrefetchScalarGridSpec(
            num_scalar_prefetch=1,
            grid=(B // bb,),
            in_specs=[
                pl.BlockSpec((bb, N, fin0), lambda i, nc: (i, 0, 0)),
                pl.BlockSpec((bb, N, N), lambda i, nc: (i, 0, 0)),
            ] + weight_specs,
            out_specs=(
                pl.BlockSpec((bb, c, fout_last), lambda i, nc: (i, 0, 0)),
                pl.BlockSpec((bb, c, c), lambda i, nc: (i, 0, 0)),
            ),
        ),
        compiler_params=pltpu.CompilerParams(
            dimension_semantics=("parallel",),          # batch axis -> megacore split
            vmem_limit_bytes=vmem_limit,
        ),
    )(node_counts, x, adj, *weight_inputs)
    return x_new, adj_new


# ---------------------------------------------------------------------------
# GraphPoolingNetwork (concrete JAX/Pallas instantiation)
# ---------------------------------------------------------------------------
class GraphPoolingNetworkPallas:
    """Deterministically-initialized dense graph pooling network.

    Structural hyper-parameters mirror the PyTorch module:
      num_node_features, layer_sizes (per-block conv widths),
      num_output_nodes (per-block cluster counts, from pool_block_args).
    """

    def __init__(self, num_node_features: int, layer_sizes: List[List[int]],
                 num_output_nodes: List[int], seed: int = 0,
                 tiny_block_threshold: int = 8):
        assert len(layer_sizes) == len(num_output_nodes)
        assert layer_sizes[0][0] == num_node_features
        for i in range(len(layer_sizes) - 1):
            # "Each block must end in the same number of features as the next one has!"
            assert layer_sizes[i][-1] == layer_sizes[i + 1][0]
        self.num_concepts = layer_sizes[-1][-1]
        self.tiny_block_threshold = tiny_block_threshold

        key = jax.random.PRNGKey(seed)
        self.blocks = []
        for sizes, n_clusters in zip(layer_sizes, num_output_nodes):
            assert len(sizes) >= 2
            convs = []
            for fin, fout in zip(sizes[:-1], sizes[1:]):
                key, kw, kb = jax.random.split(key, 3)
                w = jax.random.normal(kw, (fin, fout), jnp.float32) * (1.0 / jnp.sqrt(fin))
                b = jax.random.normal(kb, (1, fout), jnp.float32) * 0.01
                convs.append((w, b))
            key, kw, kb = jax.random.split(key, 3)
            ws = jax.random.normal(kw, (sizes[0], n_clusters), jnp.float32) * (1.0 / jnp.sqrt(sizes[0]))
            bs = jax.random.normal(kb, (1, n_clusters), jnp.float32) * 0.01
            w0, b0 = convs[0]
            self.blocks.append(dict(
                wcat=jnp.concatenate([w0, ws], axis=1),     # fused conv-0 + assignment
                bcat=jnp.concatenate([b0, bs], axis=1),
                rest=convs[1:],
                fout0=w0.shape[1],
                c=n_clusters,
                fout_last=convs[-1][0].shape[1],
            ))

    def __call__(self, x, adj, node_counts):
        B = x.shape[0]
        adj = adj.astype(jnp.bfloat16)                  # 0/1 adjacency: exact in bf16
        nc = node_counts.astype(jnp.int32)
        vmem_limit = _vmem_limit_bytes()
        for blk in self.blocks:
            N = x.shape[1]
            if N <= self.tiny_block_threshold:
                # Post-pool tensors are a few KiB: per-step pallas overhead and
                # tiny MXU passes dominate -> plain jnp (XLA fuses it).
                mask = (jnp.arange(N)[None, :, None] < nc[:, None, None]).astype(jnp.bfloat16)
                x, adj = _pool_block_math(x, adj, mask, blk["wcat"], blk["bcat"],
                                          [w for w, _ in blk["rest"]],
                                          [b for _, b in blk["rest"]],
                                          blk["fout0"], blk["c"])
            else:
                per_graph = _per_graph_vmem_bytes(N, x.shape[2], blk)
                bb = _choose_graphs_per_step(B, per_graph, int(vmem_limit * 0.85))
                x, adj = fused_pool_block(x, adj, nc, blk, bb=bb, vmem_limit=vmem_limit)
            # after pooling every graph has exactly C valid clusters
            nc = jnp.full((B,), x.shape[1], jnp.int32)
        return _final_merge(x)

    # pure-JAX reference: identical numerical recipe (shared _pool_block_math)
    def reference(self, x, adj, node_counts):
        B = x.shape[0]
        adj = adj.astype(jnp.bfloat16)
        nc = node_counts.astype(jnp.int32)
        for blk in self.blocks:
            N = x.shape[1]
            mask = (jnp.arange(N)[None, :, None] < nc[:, None, None]).astype(jnp.bfloat16)
            x, adj = _pool_block_math(x, adj, mask, blk["wcat"], blk["bcat"],
                                      [w for w, _ in blk["rest"]],
                                      [b for _, b in blk["rest"]],
                                      blk["fout0"], blk["c"])
            nc = jnp.full((B,), x.shape[1], jnp.int32)
        return _final_merge(x)


# ---------------------------------------------------------------------------
if __name__ == "__main__":
    B, N, F = 2, 16, 8
    layer_sizes = [[F, 16, 16], [16, 16]]
    num_output_nodes = [8, 4]

    key = jax.random.PRNGKey(0)
    kx, ka, _ = jax.random.split(key, 3)

    x = jax.random.normal(kx, (B, N, F), jnp.float32)
    # valid-node counts: graph 0 has 16 nodes, graph 1 has 12 nodes
    node_counts = jnp.array([16, 12], jnp.int32)
    mask = (jnp.arange(N)[None, :] < node_counts[:, None]).astype(jnp.float32)[..., None]
    # symmetric 0/1 adjacency with self-loops, restricted to valid nodes
    a = (jax.random.uniform(ka, (B, N, N)) > 0.6).astype(jnp.float32)
    adj = jnp.clip(a + jnp.swapaxes(a, 1, 2) + jnp.eye(N)[None], 0.0, 1.0)
    adj = adj * mask * jnp.swapaxes(mask, 1, 2)

    net = GraphPoolingNetworkPallas(F, layer_sizes, num_output_nodes, seed=0)

    out = jax.block_until_ready(net(x, adj, node_counts))
    ref = net.reference(x, adj, node_counts)

    assert out.shape == (B, layer_sizes[-1][-1])
    assert jnp.allclose(out, ref, atol=1e-2, rtol=2e-2), (out, ref)

    # TODO(synk): MonteCarloBlock / DifferentiablePoolingNet perturbation sampling
    # (black-box gradient estimator) is training-time only and has no forward effect.
    print("KERNEL_OK")
</pallas_src>

<mosaic_0001>
module attributes {stable_mosaic.version = 11 : i64} {
  func.func @kernel(%arg0: i32, %arg1: memref<2xi32, #tpu.memory_space<smem>>, %arg2: memref<1x16x8xf32, #tpu.memory_space<vmem>>, %arg3: memref<1x16x16xbf16, #tpu.memory_space<vmem>>, %arg4: memref<8x24xf32, #tpu.memory_space<vmem>>, %arg5: memref<1x24xf32, #tpu.memory_space<vmem>>, %arg6: memref<16x16xf32, #tpu.memory_space<vmem>>, %arg7: memref<1x16xf32, #tpu.memory_space<vmem>>, %arg8: memref<1x8x16xbf16, #tpu.memory_space<vmem>>, %arg9: memref<1x8x8xbf16, #tpu.memory_space<vmem>>) attributes {dimension_semantics = [#tpu.dimension_semantics<parallel>], iteration_bounds = array<i64: 2>, scalar_prefetch = 1 : i64, scratch_operands = 0 : i64, tpu.core_type = #tpu.core_type<tc>, window_params = [{transform_indices = @transform_0, window_bounds = array<i64: 1, 16, 8>}, {transform_indices = @transform_1, window_bounds = array<i64: 1, 16, 16>}, {pipeline_mode = #tpu.pipeline_mode<synchronous>, transform_indices = @transform_2, window_bounds = array<i64: 8, 24>}, {pipeline_mode = #tpu.pipeline_mode<synchronous>, transform_indices = @transform_3, window_bounds = array<i64: 1, 24>}, {pipeline_mode = #tpu.pipeline_mode<synchronous>, transform_indices = @transform_4, window_bounds = array<i64: 16, 16>}, {pipeline_mode = #tpu.pipeline_mode<synchronous>, transform_indices = @transform_5, window_bounds = array<i64: 1, 16>}, {transform_indices = @transform_6, window_bounds = array<i64: 1, 8, 16>}, {transform_indices = @transform_7, window_bounds = array<i64: 1, 8, 8>}]} {
    %0 = tpu.iota {dimensions = array<i32: 1>} : vector<1x16x1xi32>
    %1 = arith.index_cast %arg0 : i32 to index
    %2 = memref.load %arg1[%1] : memref<2xi32, #tpu.memory_space<smem>>
    %3 = vector.broadcast %2 : i32 to vector<1x16x1xi32>
    %4 = arith.cmpi slt, %0, %3 : vector<1x16x1xi32>
    %5 = arith.extui %4 : vector<1x16x1xi1> to vector<1x16x1xi32>
    %6 = arith.sitofp %5 : vector<1x16x1xi32> to vector<1x16x1xf32>
    %7 = arith.truncf %6 : vector<1x16x1xf32> to vector<1x16x1xbf16>
    %c0 = arith.constant 0 : index
    %c0_0 = arith.constant 0 : index
    %c0_1 = arith.constant 0 : index
    %8 = vector.load %arg3[%c0, %c0_0, %c0_1] : memref<1x16x16xbf16, #tpu.memory_space<vmem>>, vector<1x16x16xbf16>
    %c0_2 = arith.constant 0 : index
    %c0_3 = arith.constant 0 : index
    %c0_4 = arith.constant 0 : index
    %9 = vector.load %arg2[%c0_2, %c0_3, %c0_4] : memref<1x16x8xf32, #tpu.memory_space<vmem>>, vector<1x16x8xf32>
    %c0_5 = arith.constant 0 : index
    %c0_6 = arith.constant 0 : index
    %10 = vector.load %arg6[%c0_5, %c0_6] : memref<16x16xf32, #tpu.memory_space<vmem>>, vector<16x16xf32>
    %c0_7 = arith.constant 0 : index
    %c0_8 = arith.constant 0 : index
    %11 = vector.load %arg7[%c0_7, %c0_8] : memref<1x16xf32, #tpu.memory_space<vmem>>, vector<1x16xf32>
    %c0_9 = arith.constant 0 : index
    %c0_10 = arith.constant 0 : index
    %12 = vector.load %arg4[%c0_9, %c0_10] : memref<8x24xf32, #tpu.memory_space<vmem>>, vector<8x24xf32>
    %c0_11 = arith.constant 0 : index
    %c0_12 = arith.constant 0 : index
    %13 = vector.load %arg5[%c0_11, %c0_12] : memref<1x24xf32, #tpu.memory_space<vmem>>, vector<1x24xf32>
    %14 = arith.truncf %9 : vector<1x16x8xf32> to vector<1x16x8xbf16>
    "tpu.trace_start"() <{level = 10 : i32, message = "bnm,bmf->bnf"}> : () -> ()
    %cst = arith.constant dense<0.000000e+00> : vector<1x16x8xf32>
    %15 = tpu.matmul %8, %14, %cst {dimension_numbers = #tpu.dot_dimension_numbers<[2], [1], [1], [2], [0, 0, 0, 1, 1, 2], [0], [0]>} : vector<1x16x16xbf16>, vector<1x16x8xbf16>, vector<1x16x8xf32> -> vector<1x16x8xf32>
    "tpu.trace_stop"() : () -> ()
    %16 = vector.shape_cast %15 : vector<1x16x8xf32> to vector<16x8xf32>
    %17 = arith.truncf %16 : vector<16x8xf32> to vector<16x8xbf16>
    %18 = arith.truncf %12 : vector<8x24xf32> to vector<8x24xbf16>
    %cst_13 = arith.constant dense<0.000000e+00> : vector<16x24xf32>
    %19 = tpu.matmul %17, %18, %cst_13 {dimension_numbers = #tpu.dot_dimension_numbers<[1], [0], [0], [1], [0, 0, 1, 1], [], []>} : vector<16x8xbf16>, vector<8x24xbf16>, vector<16x24xf32> -> vector<16x24xf32>
    %20 = vector.shape_cast %19 : vector<16x24xf32> to vector<1x16x24xf32>
    %21 = vector.shape_cast %13 : vector<1x24xf32> to vector<1x1x24xf32>
    %22 = vector.broadcast %21 : vector<1x1x24xf32> to vector<1x16x24xf32>
    %23 = arith.addf %20, %22 : vector<1x16x24xf32>
    %24 = vector.extract_strided_slice %23 {offsets = [0, 0, 0], sizes = [1, 16, 16], strides = [1, 1, 1]} : vector<1x16x24xf32> to vector<1x16x16xf32>
    %25 = vector.extract_strided_slice %23 {offsets = [0, 0, 16], sizes = [1, 16, 8], strides = [1, 1, 1]} : vector<1x16x24xf32> to vector<1x16x8xf32>
    %cst_14 = arith.constant 0.000000e+00 : f32
    %26 = vector.broadcast %cst_14 : f32 to vector<1x16x16xf32>
    %27 = arith.maximumf %24, %26 : vector<1x16x16xf32>
    %28 = arith.truncf %27 : vector<1x16x16xf32> to vector<1x16x16xbf16>
    %29 = vector.broadcast %7 : vector<1x16x1xbf16> to vector<1x16x16xbf16>
    %30 = arith.mulf %28, %29 : vector<1x16x16xbf16>
    %31 = vector.shape_cast %30 : vector<1x16x16xbf16> to vector<16x16xbf16>
    %32 = arith.truncf %10 : vector<16x16xf32> to vector<16x16xbf16>
    %cst_15 = arith.constant dense<0.000000e+00> : vector<16x16xf32>
    %33 = tpu.matmul %31, %32, %cst_15 {dimension_numbers = #tpu.dot_dimension_numbers<[1], [0], [0], [1], [0, 0, 1, 1], [], []>} : vector<16x16xbf16>, vector<16x16xbf16>, vector<16x16xf32> -> vector<16x16xf32>
    %34 = vector.shape_cast %33 : vector<16x16xf32> to vector<1x16x16xf32>
    %35 = arith.truncf %34 : vector<1x16x16xf32> to vector<1x16x16xbf16>
    "tpu.trace_start"() <{level = 10 : i32, message = "bnm,bmf->bnf"}> : () -> ()
    %cst_16 = arith.constant dense<0.000000e+00> : vector<1x16x16xf32>
    %36 = tpu.matmul %8, %35, %cst_16 {dimension_numbers = #tpu.dot_dimension_numbers<[2], [1], [1], [2], [0, 0, 0, 1, 1, 2], [0], [0]>} : vector<1x16x16xbf16>, vector<1x16x16xbf16>, vector<1x16x16xf32> -> vector<1x16x16xf32>
    "tpu.trace_stop"() : () -> ()
    %37 = vector.shape_cast %11 : vector<1x16xf32> to vector<1x1x16xf32>
    %38 = vector.broadcast %37 : vector<1x1x16xf32> to vector<1x16x16xf32>
    %39 = arith.addf %36, %38 : vector<1x16x16xf32>
    %cst_17 = arith.constant 0.000000e+00 : f32
    %40 = vector.broadcast %cst_17 : f32 to vector<1x16x16xf32>
    %41 = arith.maximumf %39, %40 : vector<1x16x16xf32>
    %42 = arith.truncf %41 : vector<1x16x16xf32> to vector<1x16x16xbf16>
    %43 = vector.broadcast %7 : vector<1x16x1xbf16> to vector<1x16x16xbf16>
    %44 = arith.mulf %42, %43 : vector<1x16x16xbf16>
    %cst_18 = arith.constant dense<0xFF800000> : vector<1x16xf32>
    %45 = vector.multi_reduction <maximumf>, %25, %cst_18 [2] : vector<1x16x8xf32> to vector<1x16xf32>
    %46 = vector.shape_cast %45 : vector<1x16xf32> to vector<1x16x1xf32>
    %47 = vector.broadcast %46 : vector<1x16x1xf32> to vector<1x16x8xf32>
    %48 = arith.subf %25, %47 : vector<1x16x8xf32>
    %49 = math.exp %48 : vector<1x16x8xf32>
    %cst_19 = arith.constant dense<0.000000e+00> : vector<1x16xf32>
    %50 = vector.multi_reduction <add>, %49, %cst_19 [2] : vector<1x16x8xf32> to vector<1x16xf32>
    %51 = vector.shape_cast %50 : vector<1x16xf32> to vector<1x16x1xf32>
    %52 = vector.broadcast %51 : vector<1x16x1xf32> to vector<1x16x8xf32>
    %53 = arith.divf %49, %52 : vector<1x16x8xf32>
    %54 = arith.truncf %53 : vector<1x16x8xf32> to vector<1x16x8xbf16>
    %55 = vector.broadcast %7 : vector<1x16x1xbf16> to vector<1x16x8xbf16>
    %56 = arith.mulf %54, %55 : vector<1x16x8xbf16>
    "tpu.trace_start"() <{level = 10 : i32, message = "bnc,bnf->bcf"}> : () -> ()
    %cst_20 = arith.constant dense<0.000000e+00> : vector<1x8x16xf32>
    %57 = tpu.matmul %56, %44, %cst_20 {dimension_numbers = #tpu.dot_dimension_numbers<[1], [1], [2], [2], [0, 0, 0, 2, 1, 2], [0], [0]>} : vector<1x16x8xbf16>, vector<1x16x16xbf16>, vector<1x8x16xf32> -> vector<1x8x16xf32>
    "tpu.trace_stop"() : () -> ()
    "tpu.trace_start"() <{level = 10 : i32, message = "bnc,bnm->bcm"}> : () -> ()
    %cst_21 = arith.constant dense<0.000000e+00> : vector<1x8x16xf32>
    %58 = tpu.matmul %56, %8, %cst_21 {dimension_numbers = #tpu.dot_dimension_numbers<[1], [1], [2], [2], [0, 0, 0, 2, 1, 2], [0], [0]>} : vector<1x16x8xbf16>, vector<1x16x16xbf16>, vector<1x8x16xf32> -> vector<1x8x16xf32>
    "tpu.trace_stop"() : () -> ()
    %59 = arith.truncf %58 : vector<1x8x16xf32> to vector<1x8x16xbf16>
    "tpu.trace_start"() <{level = 10 : i32, message = "bcm,bmk->bck"}> : () -> ()
    %cst_22 = arith.constant dense<0.000000e+00> : vector<1x8x8xf32>
    %60 = tpu.matmul %59, %56, %cst_22 {dimension_numbers = #tpu.dot_dimension_numbers<[2], [1], [1], [2], [0, 0, 0, 1, 1, 2], [0], [0]>} : vector<1x8x16xbf16>, vector<1x16x8xbf16>, vector<1x8x8xf32> -> vector<1x8x8xf32>
    "tpu.trace_stop"() : () -> ()
    %61 = arith.truncf %57 : vector<1x8x16xf32> to vector<1x8x16xbf16>
    %62 = arith.truncf %60 : vector<1x8x8xf32> to vector<1x8x8xbf16>
    %c0_23 = arith.constant 0 : index
    %c0_24 = arith.constant 0 : index
    %c0_25 = arith.constant 0 : index
    %63 = vector.load %arg8[%c0_23, %c0_24, %c0_25] : memref<1x8x16xbf16, #tpu.memory_space<vmem>>, vector<1x8x16xbf16>
    tpu.vector_store %arg8[%c0_23, %c0_24, %c0_25], %61 {strides = array<i32>} : memref<1x8x16xbf16, #tpu.memory_space<vmem>>, vector<1x8x16xbf16>,
    %c0_26 = arith.constant 0 : index
    %c0_27 = arith.constant 0 : index
    %c0_28 = arith.constant 0 : index
    %64 = vector.load %arg9[%c0_26, %c0_27, %c0_28] : memref<1x8x8xbf16, #tpu.memory_space<vmem>>, vector<1x8x8xbf16>
    tpu.vector_store %arg9[%c0_26, %c0_27, %c0_28], %62 {strides = array<i32>} : memref<1x8x8xbf16, #tpu.memory_space<vmem>>, vector<1x8x8xbf16>,
    return
  }
  func.func @transform_0(%arg0: i32, %arg1: memref<2xi32, #tpu.memory_space<smem>>) -> (i32, i32, i32) {
    %c0_i32 = arith.constant 0 : i32
    %c0_i32_0 = arith.constant 0 : i32
    %c0_i32_1 = arith.constant 0 : i32
    return %arg0, %c0_i32, %c0_i32_0 : i32, i32, i32
  }
  func.func @transform_1(%arg0: i32, %arg1: memref<2xi32, #tpu.memory_space<smem>>) -> (i32, i32, i32) {
    %c0_i32 = arith.constant 0 : i32
    %c0_i32_0 = arith.constant 0 : i32
    %c0_i32_1 = arith.constant 0 : i32
    return %arg0, %c0_i32, %c0_i32_0 : i32, i32, i32
  }
  func.func @transform_2(%arg0: i32, %arg1: memref<2xi32, #tpu.memory_space<smem>>) -> (i32, i32) {
    %c0_i32 = arith.constant 0 : i32
    %c0_i32_0 = arith.constant 0 : i32
    %c0_i32_1 = arith.constant 0 : i32
    return %c0_i32, %c0_i32_0 : i32, i32
  }
  func.func @transform_3(%arg0: i32, %arg1: memref<2xi32, #tpu.memory_space<smem>>) -> (i32, i32) {
    %c0_i32 = arith.constant 0 : i32
    %c0_i32_0 = arith.constant 0 : i32
    %c0_i32_1 = arith.constant 0 : i32
    return %c0_i32, %c0_i32_0 : i32, i32
  }
  func.func @transform_4(%arg0: i32, %arg1: memref<2xi32, #tpu.memory_space<smem>>) -> (i32, i32) {
    %c0_i32 = arith.constant 0 : i32
    %c0_i32_0 = arith.constant 0 : i32
    %c0_i32_1 = arith.constant 0 : i32
    return %c0_i32, %c0_i32_0 : i32, i32
  }
  func.func @transform_5(%arg0: i32, %arg1: memref<2xi32, #tpu.memory_space<smem>>) -> (i32, i32) {
    %c0_i32 = arith.constant 0 : i32
    %c0_i32_0 = arith.constant 0 : i32
    %c0_i32_1 = arith.constant 0 : i32
    return %c0_i32, %c0_i32_0 : i32, i32
  }
  func.func @transform_6(%arg0: i32, %arg1: memref<2xi32, #tpu.memory_space<smem>>) -> (i32, i32, i32) {
    %c0_i32 = arith.constant 0 : i32
    %c0_i32_0 = arith.constant 0 : i32
    %c0_i32_1 = arith.constant 0 : i32
    return %arg0, %c0_i32, %c0_i32_0 : i32, i32, i32
  }
  func.func @transform_7(%arg0: i32, %arg1: memref<2xi32, #tpu.memory_space<smem>>) -> (i32, i32, i32) {
    %c0_i32 = arith.constant 0 : i32
    %c0_i32_0 = arith.constant 0 : i32
    %c0_i32_1 = arith.constant 0 : i32
    return %arg0, %c0_i32, %c0_i32_0 : i32, i32, i32
  }
}

</mosaic_0001>

<llo_original>
// kernel: tpu_custom_call.1
$region0: #{tpu_custom_call.1}
  #allocation0 [shape = 'u32[]', space=smem, size = 0x4, offset = 0x4, fixed_abs, tag = 'smem constant byte address 0x4 - core index']
  #allocation1 [shape = 'u32[144,128]{1,0:T(1,128)}', space=vmem, size = 0x12000, scoped, tag = 'internal scratch']
  #allocation2 [shape = 's32[1]{0}', space=sflag, size = 0x4, scoped, tag = 'scoped memory for tpu_custom_call.1']
  #allocation3 [shape = 'u8[512]{0}', space=smem, size = 0x200, scoped, tag = 'prefetched SMEM operand 0']
  %s0 = inlined_call_operand.vmem [shape: s32[2], index: 0, kind: input, shape index: {}]
  %s1 = inlined_call_operand.vmem [shape: f32[2,16,8], index: 1, kind: input, shape index: {}]
  %s2 = inlined_call_operand.vmem [shape: bf16[2,16,16], index: 2, kind: input, shape index: {}]
  %s3 = inlined_call_operand.vmem [shape: f32[8,24], index: 3, kind: input, shape index: {}]
  %s4 = inlined_call_operand.vmem [shape: f32[1,24], index: 4, kind: input, shape index: {}]
  %s5 = inlined_call_operand.vmem [shape: f32[16,16], index: 5, kind: input, shape index: {}]
  %s6 = inlined_call_operand.vmem [shape: f32[1,16], index: 6, kind: input, shape index: {}]
  %s7 = inlined_call_operand.hbm [shape: bf16[2,8,16], index: 7, kind: output, shape index: {0}]
  %s8 = inlined_call_operand.hbm [shape: bf16[2,8,8], index: 8, kind: output, shape index: {1}]
  %9 = xla_tuple %s7, %s8
  %s10 = sld [smem:[#allocation0]]
  $region65: #{tpu_custom_call.1} parent=0
    _
  %s12 = ssub.s32 1, %s10
  %s13 = scalar_select 0, %s12, %s10
  %s14 = sshll.u32 %s0, 4
  %s15 = int_to_ptr.vmem [resolvable:$true] %s14
  %17 = dma.vmem_to_smem %s15, 16, [#allocation3], [#allocation2]
  %18 = dma.done [#allocation2], 16
  %19 = sfence
  $region1: #{tpu_custom_call.1} parent=0
    #allocation4 [shape = 'u8[4096]{0}', space=vmem, size = 0x1000, scoped, tag = 'output window, operand 0']
    #allocation5 [shape = 's32[2]{0}', space=sflag, size = 0x8, scoped, tag = 'scoped memory for tpu_custom_call.1']
    #allocation6 [shape = 'u8[4096]{0}', space=vmem, size = 0x1000, scoped, tag = 'output window, operand 1']
    #allocation7 [shape = 's32[2]{0}', space=sflag, size = 0x8, scoped, tag = 'scoped memory for tpu_custom_call.1']
    %20 = vsyncpa [#allocation5], 0
    %s21 = scalar_lea.sflag [#allocation5], 1
    %22 = vsyncpa %s21, 0
    %23 = vsyncpa [#allocation7], 0
    %s24 = scalar_lea.sflag [#allocation7], 1
    %25 = vsyncpa %s24, 0
    loop: start=0, step=1, limit=4
    $region2: #{tpu_custom_call.1} parent=1 // loop_pre_header
      _
    $region3: #{tpu_custom_call.1} parent=1 // loop_header
      %s27 = sphi 0, %s31
      %p28 = scmp.ge.s32.totalorder %s27, 4
      %s37 = sphi 0, %s39
      %s40 = sphi 0, %s37
      %s41 = sphi 0, %s40
      %s57 = sphi 0, %s41
      %s63 = sphi 0, %s65
      %s66 = sphi 0, %s63
      %s67 = sphi 0, %s66
      %s83 = sphi 0, %s67
      %s87 = sphi 0, %s87
      %s89 = sphi 0, %s87
      %s90 = sphi 0, %s89
      %s104 = sphi 0, %s90
      %s108 = sphi 0, %s108
      %s110 = sphi 0, %s108
      %s111 = sphi 0, %s110
      %s125 = sphi 0, %s111
      %s129 = sphi 0, %s129
      %s131 = sphi 0, %s129
      %s132 = sphi 0, %s131
      %s146 = sphi 0, %s132
      %s150 = sphi 0, %s150
      %s152 = sphi 0, %s150
      %s153 = sphi 0, %s152
      %s167 = sphi 0, %s153
      %s173 = sphi 0, %s175
      %s176 = sphi 0, %s173
      %s177 = sphi 0, %s176
      %s193 = sphi 0, %s177
      %s199 = sphi 0, %s201
      %s202 = sphi 0, %s199
      %s203 = sphi 0, %s202
      %s219 = sphi 0, %s203
    $region4: #{tpu_custom_call.1} parent=1 // loop_header_branch
      %30 = sbr.rel (%p28) target = $region8
    $region5: #{tpu_custom_call.1} parent=1 // loop_body
      %s32 = ssub.s32 %s27, 1
      %s33 = ssub.s32 %s27, 2
      %s34 = sadd.s32 %s27, 1
      %s35 = ssub.s32 %s27, %s34
      %p36 = scmp.eq.s32.totalorder %s35, 0
      %s38 = sadd.s32 %s37, 1
      %s39 = scalar_select %p36, %s37, %s38
      %p42 = pneg %p36
      %p43 = scmp.eq.s32.totalorder %s27, 1
      %p44 = por %p42, %p43
      %p45 = scmp.ne.s32.totalorder %s37, %s40
      %p46 = scmp.eq.s32.totalorder %s27, 0
      %p47 = por %p45, %p46
      %p48 = scmp.ne.s32.totalorder %s37, %s40
      %p49 = scmp.eq.s32.totalorder %s32, 1
      %p50 = por %p48, %p49
      %p51 = scmp.ne.s32.totalorder %s40, %s41
      %p52 = scmp.eq.s32.totalorder %s32, 0
      %p53 = por %p51, %p52
      %p54 = scmp.ne.s32.totalorder %s40, %s41
      %p55 = scmp.eq.s32.totalorder %s33, 1
      %p56 = por %p54, %p55
      %p58 = scmp.ne.s32.totalorder %s41, %s57
      %p59 = scmp.eq.s32.totalorder %s33, 0
      %p60 = por %p58, %p59
      %s61 = ssub.s32 %s27, %s34
      %p62 = scmp.eq.s32.totalorder %s61, 0
      %s64 = sadd.s32 %s63, 1
      %s65 = scalar_select %p62, %s63, %s64
      %p68 = pneg %p62
      %p69 = scmp.eq.s32.totalorder %s27, 1
      %p70 = por %p68, %p69
      %p71 = scmp.ne.s32.totalorder %s63, %s66
      %p72 = scmp.eq.s32.totalorder %s27, 0
      %p73 = por %p71, %p72
      %p74 = scmp.ne.s32.totalorder %s63, %s66
      %p75 = scmp.eq.s32.totalorder %s32, 1
      %p76 = por %p74, %p75
      %p77 = scmp.ne.s32.totalorder %s66, %s67
      %p78 = scmp.eq.s32.totalorder %s32, 0
      %p79 = por %p77, %p78
      %p80 = scmp.ne.s32.totalorder %s66, %s67
      %p81 = scmp.eq.s32.totalorder %s33, 1
      %p82 = por %p80, %p81
      %p84 = scmp.ne.s32.totalorder %s67, %s83
      %p85 = scmp.eq.s32.totalorder %s33, 0
      %p86 = por %p84, %p85
      %s88 = sadd.s32 %s87, 1
      %p91 = scmp.eq.s32.totalorder %s27, 1
      %p92 = scmp.ne.s32.totalorder %s87, %s89
      %p93 = scmp.eq.s32.totalorder %s27, 0
      %p94 = por %p92, %p93
      %p95 = scmp.ne.s32.totalorder %s87, %s89
      %p96 = scmp.eq.s32.totalorder %s32, 1
      %p97 = por %p95, %p96
      %p98 = scmp.ne.s32.totalorder %s89, %s90
      %p99 = scmp.eq.s32.totalorder %s32, 0
      %p100 = por %p98, %p99
      %p101 = scmp.ne.s32.totalorder %s89, %s90
      %p102 = scmp.eq.s32.totalorder %s33, 1
      %p103 = por %p101, %p102
      %p105 = scmp.ne.s32.totalorder %s90, %s104
      %p106 = scmp.eq.s32.totalorder %s33, 0
      %p107 = por %p105, %p106
      %s109 = sadd.s32 %s108, 1
      %p112 = scmp.eq.s32.totalorder %s27, 1
      %p113 = scmp.ne.s32.totalorder %s108, %s110
      %p114 = scmp.eq.s32.totalorder %s27, 0
      %p115 = por %p113, %p114
      %p116 = scmp.ne.s32.totalorder %s108, %s110
      %p117 = scmp.eq.s32.totalorder %s32, 1
      %p118 = por %p116, %p117
      %p119 = scmp.ne.s32.totalorder %s110, %s111
      %p120 = scmp.eq.s32.totalorder %s32, 0
      %p121 = por %p119, %p120
      %p122 = scmp.ne.s32.totalorder %s110, %s111
      %p123 = scmp.eq.s32.totalorder %s33, 1
      %p124 = por %p122, %p123
      %p126 = scmp.ne.s32.totalorder %s111, %s125
      %p127 = scmp.eq.s32.totalorder %s33, 0
      %p128 = por %p126, %p127
      %s130 = sadd.s32 %s129, 1
      %p133 = scmp.eq.s32.totalorder %s27, 1
      %p134 = scmp.ne.s32.totalorder %s129, %s131
      %p135 = scmp.eq.s32.totalorder %s27, 0
      %p136 = por %p134, %p135
      %p137 = scmp.ne.s32.totalorder %s129, %s131
      %p138 = scmp.eq.s32.totalorder %s32, 1
      %p139 = por %p137, %p138
      %p140 = scmp.ne.s32.totalorder %s131, %s132
      %p141 = scmp.eq.s32.totalorder %s32, 0
      %p142 = por %p140, %p141
      %p143 = scmp.ne.s32.totalorder %s131, %s132
      %p144 = scmp.eq.s32.totalorder %s33, 1
      %p145 = por %p143, %p144
      %p147 = scmp.ne.s32.totalorder %s132, %s146
      %p148 = scmp.eq.s32.totalorder %s33, 0
      %p149 = por %p147, %p148
      %s151 = sadd.s32 %s150, 1
      %p154 = scmp.eq.s32.totalorder %s27, 1
      %p155 = scmp.ne.s32.totalorder %s150, %s152
      %p156 = scmp.eq.s32.totalorder %s27, 0
      %p157 = por %p155, %p156
      %p158 = scmp.ne.s32.totalorder %s150, %s152
      %p159 = scmp.eq.s32.totalorder %s32, 1
      %p160 = por %p158, %p159
      %p161 = scmp.ne.s32.totalorder %s152, %s153
      %p162 = scmp.eq.s32.totalorder %s32, 0
      %p163 = por %p161, %p162
      %p164 = scmp.ne.s32.totalorder %s152, %s153
      %p165 = scmp.eq.s32.totalorder %s33, 1
      %p166 = por %p164, %p165
      %p168 = scmp.ne.s32.totalorder %s153, %s167
      %p169 = scmp.eq.s32.totalorder %s33, 0
      %p170 = por %p168, %p169
      %s171 = ssub.s32 %s27, %s34
      %p172 = scmp.eq.s32.totalorder %s171, 0
      %s174 = sadd.s32 %s173, 1
      %s175 = scalar_select %p172, %s173, %s174
      %p178 = pneg %p172
      %p179 = scmp.eq.s32.totalorder %s27, 1
      %p180 = por %p178, %p179
      %p181 = scmp.ne.s32.totalorder %s173, %s176
      %p182 = scmp.eq.s32.totalorder %s27, 0
      %p183 = por %p181, %p182
      %p184 = scmp.ne.s32.totalorder %s173, %s176
      %p185 = scmp.eq.s32.totalorder %s32, 1
      %p186 = por %p184, %p185
      %p187 = scmp.ne.s32.totalorder %s176, %s177
      %p188 = scmp.eq.s32.totalorder %s32, 0
      %p189 = por %p187, %p188
      %p190 = scmp.ne.s32.totalorder %s176, %s177
      %p191 = scmp.eq.s32.totalorder %s33, 1
      %p192 = por %p190, %p191
      %p194 = scmp.ne.s32.totalorder %s177, %s193
      %p195 = scmp.eq.s32.totalorder %s33, 0
      %p196 = por %p194, %p195
      %s197 = ssub.s32 %s27, %s34
      %p198 = scmp.eq.s32.totalorder %s197, 0
      %s200 = sadd.s32 %s199, 1
      %s201 = scalar_select %p198, %s199, %s200
      %p204 = pneg %p198
      %p205 = scmp.eq.s32.totalorder %s27, 1
      %p206 = por %p204, %p205
      %p207 = scmp.ne.s32.totalorder %s199, %s202
      %p208 = scmp.eq.s32.totalorder %s27, 0
      %p209 = por %p207, %p208
      %p210 = scmp.ne.s32.totalorder %s199, %s202
      %p211 = scmp.eq.s32.totalorder %s32, 1
      %p212 = por %p210, %p211
      %p213 = scmp.ne.s32.totalorder %s202, %s203
      %p214 = scmp.eq.s32.totalorder %s32, 0
      %p215 = por %p213, %p214
      %p216 = scmp.ne.s32.totalorder %s202, %s203
      %p217 = scmp.eq.s32.totalorder %s33, 1
      %p218 = por %p216, %p217
      %p220 = scmp.ne.s32.totalorder %s203, %s219
      %p221 = scmp.eq.s32.totalorder %s33, 0
      %p222 = por %p220, %p221
      %p223 = scmp.le.s32.totalorder 1, %s27
      %p224 = scmp.lt.s32.totalorder %s27, 3
      %p225 = pnand %p223, %p224
      %p226 = pneg %p225
      // Predicated region
      $region9: #{tpu_custom_call.1} parent=5 // pred_check
        _
      $region10: #{tpu_custom_call.1} parent=5 // pred_check_branch
        %228 = sbr.rel (%p225) target = $region12
      $region11: #{tpu_custom_call.1} parent=5 // pred_region
        %s229 = ssub.s32 %s27, 1
        // Predicated region
        $region13: #{tpu_custom_call.1} parent=11 // pred_check
          %p230 = pneg %p100
        $region14: #{tpu_custom_call.1} parent=11 // pred_check_branch
          %232 = sbr.rel (%p230) target = $region16
        $region15: #{tpu_custom_call.1} parent=11 // pred_region
          _
        $region16: #{tpu_custom_call.1} parent=11 // pred_fallthru
          _
        // Predicated region
        $region17: #{tpu_custom_call.1} parent=11 // pred_check
          %p233 = pneg %p121
        $region18: #{tpu_custom_call.1} parent=11 // pred_check_branch
          %235 = sbr.rel (%p233) target = $region20
        $region19: #{tpu_custom_call.1} parent=11 // pred_region
          _
        $region20: #{tpu_custom_call.1} parent=11 // pred_fallthru
          _
        // Predicated region
        $region21: #{tpu_custom_call.1} parent=11 // pred_check
          %p236 = pneg %p142
        $region22: #{tpu_custom_call.1} parent=11 // pred_check_branch
          %238 = sbr.rel (%p236) target = $region24
        $region23: #{tpu_custom_call.1} parent=11 // pred_region
          _
        $region24: #{tpu_custom_call.1} parent=11 // pred_fallthru
          _
        // Predicated region
        $region25: #{tpu_custom_call.1} parent=11 // pred_check
          %p239 = pneg %p163
        $region26: #{tpu_custom_call.1} parent=11 // pred_check_branch
          %241 = sbr.rel (%p239) target = $region28
        $region27: #{tpu_custom_call.1} parent=11 // pred_region
          _
        $region28: #{tpu_custom_call.1} parent=11 // pred_fallthru
          _
      $region12: #{tpu_custom_call.1} parent=5 // pred_fallthru
        _
      %p242 = scmp.lt.s32.totalorder %s27, 2
      // Predicated region
      $region29: #{tpu_custom_call.1} parent=5 // pred_check
        %p243 = pneg %p242
      $region30: #{tpu_custom_call.1} parent=5 // pred_check_branch
        %245 = sbr.rel (%p243) target = $region32
      $region31: #{tpu_custom_call.1} parent=5 // pred_region
        // Predicated region
        $region33: #{tpu_custom_call.1} parent=31 // pred_check
          %p246 = pneg %p47
        $region34: #{tpu_custom_call.1} parent=31 // pred_check_branch
          %248 = sbr.rel (%p246) target = $region36
        $region35: #{tpu_custom_call.1} parent=31 // pred_region
          %p249 = scmp.lt.s32.totalorder %s27, 1
          %s250 = scalar_select %p249, %s27, 1
          %s251 = smul.addr %s250, 2
          %s252 = smul.addr %s251, 8
          %s253 = scalar_lea.vmem %s1, %s252
        $region36: #{tpu_custom_call.1} parent=31 // pred_fallthru
          _
        // Predicated region
        $region37: #{tpu_custom_call.1} parent=31 // pred_check
          %p254 = pneg %p73
        $region38: #{tpu_custom_call.1} parent=31 // pred_check_branch
          %256 = sbr.rel (%p254) target = $region40
        $region39: #{tpu_custom_call.1} parent=31 // pred_region
          %p257 = scmp.lt.s32.totalorder %s27, 1
          %s258 = scalar_select %p257, %s27, 1
          %s259 = smul.addr %s258, 2
          %s260 = smul.addr %s259, 4
          %s261 = scalar_lea.vmem %s2, %s260
        $region40: #{tpu_custom_call.1} parent=31 // pred_fallthru
          _
      $region32: #{tpu_custom_call.1} parent=5 // pred_fallthru
        _
      %p262 = scmp.le.s32.totalorder 1, %s27
      %p263 = scmp.lt.s32.totalorder %s27, 3
      %p264 = pnand %p262, %p263
      %p265 = pneg %p264
      // Predicated region
      $region41: #{tpu_custom_call.1} parent=5 // pred_check
        _
      $region42: #{tpu_custom_call.1} parent=5 // pred_check_branch
        %267 = sbr.rel (%p264) target = $region44
      $region43: #{tpu_custom_call.1} parent=5 // pred_region
        %s268 = ssub.s32 %s27, 1
        %p269 = scmp.lt.s32.totalorder %s32, 1
        %s270 = scalar_select %p269, %s32, 1
        %s271 = smul.addr %s270, 2
        %s272 = smul.addr %s271, 8
        %s273 = scalar_lea.vmem %s1, %s272
        %p274 = pneg %p53
        %p275 = pneg %p50
        %p276 = scmp.lt.s32.totalorder %s32, 1
        %s277 = scalar_select %p276, %s32, 1
        %s278 = smul.addr %s277, 2
        %s279 = smul.addr %s278, 4
        %s280 = scalar_lea.vmem %s2, %s279
        %p281 = pneg %p79
        %p282 = pneg %p76
        %p283 = pneg %p100
        %p284 = pneg %p97
        %p285 = pneg %p121
        %p286 = pneg %p118
        %p287 = pneg %p142
        %p288 = pneg %p139
        %p289 = pneg %p163
        %p290 = pneg %p160
        %p291 = pneg %p189
        %p292 = pneg %p186
        %s293 = sand.u32 %s176, 1
        %s294 = scalar_lea.sflag [#allocation5], %s293
        %s295 = sand.u32 %s176, 1
        %s296 = smul.addr %s295, 4
        %s297 = scalar_lea.vmem [#allocation4], %s296
        %p298 = pneg %p215
        %p299 = pneg %p212
        %s300 = sand.u32 %s202, 1
        %s301 = scalar_lea.sflag [#allocation7], %s300
        %s302 = sand.u32 %s202, 1
        %s303 = smul.addr %s302, 4
        %s304 = scalar_lea.vmem [#allocation6], %s303
        %p305 = scmp.lt.s32.totalorder %s32, 1
        %s306 = scalar_select %p305, %s32, 1
        %s307 = smul.addr %s306, 2
        %s308 = smul.addr %s307, 8
        %s309 = scalar_lea.vmem %s1, %s308
        %p310 = scmp.lt.s32.totalorder %s32, 1
        %s311 = scalar_select %p310, %s32, 1
        %s312 = smul.addr %s311, 2
        %s313 = smul.addr %s312, 4
        %s314 = scalar_lea.vmem %s2, %s313
        %v316 = vlaneseq
        %v317 = vshrl.u32 %v316, 7
        %v318 = vadd.s32 %v317, 8
        %s319 = sld [smem:[#allocation3 + %s32]]
        %v320 = vstv %s319
        %vm321 = vcmp.lt.s32.totalorder %v317, %v320
        %vm322 = vcmp.lt.s32.totalorder %v318, %v320
        %v323 = vsel %vm321, 1, 0
        %v324 = vsel %vm322, 1, 0
        %v325 = vcvt.s32.f32 %v323
        %v326 = vcvt.s32.f32 %v324
        %v327 = vpack.c.bf16 %v326, %v325
        %v328 = vld [vmem:[%s314] sm:$0xf]
        %v329 = vld [vmem:[%s314 + $0x4] sm:$0xf]
        %v330 = vld [vmem:[%s309] sm:$0xff]
        %v331 = vld [vmem:[%s309 + $0x8] sm:$0xff]
        %v332 = vld [vmem:[%s5] sm:$0xff]
        %v333 = vld [vmem:[%s5 + $0x8] sm:$0xff]
        %v334 = vld [vmem:[%s6] sm:$0x1]
        %v335 = vld [vmem:[%s3] sm:$0xff]
        %v336 = vld [vmem:[%s4] sm:$0x1]
        %v337 = vpack.c.bf16 %v331, %v330
        %v340 = vunpack.c.l.b16 %v328
        %v341 = vunpack.c.l.b16 %v329
        %v342 = vpack.c.b16 %v341, %v340
        %vm343 = vcmask 130048
        %v345 = vsel %vm343, %v342, 0
        %347 = vmatprep.subr.bf16.mxu0 0
        %348 = vmatpush1.bf16.msra.mxu0 %v337
        %349 = vmatprep.subr.bf16.mxu0 0
        %350 = vmatpush1.bf16.msra.mxu0 0
        %351 = vmatprep.subr.bf16.mxu0 0
        %352 = vmatpush1.bf16.msra.mxu0 0
        %353 = vmatprep.subr.bf16.mxu0 0
        %354 = vmatpush1.bf16.msra.mxu0 0
        %355 = vmatprep.subr.bf16.mxu0 0
        %356 = vmatpush1.bf16.msra.mxu0 0
        %357 = vmatprep.subr.bf16.mxu0 0
        %358 = vmatpush1.bf16.msra.mxu0 0
        %359 = vmatprep.subr.bf16.mxu0 0
        %360 = vmatpush1.bf16.msra.mxu0 0
        %361 = vmatprep.subr.bf16.mxu0 0
        %362 = vmatpush1.bf16.msra.mxu0 0
        %363 = vmatprep.subr.bf16.mxu0 0
        %364 = vmatpush1.bf16.msra.mxu0 0
        %365 = vmatprep.subr.bf16.mxu0 0
        %366 = vmatpush1.bf16.msra.mxu0 0
        %367 = vmatprep.subr.bf16.mxu0 0
        %368 = vmatpush1.bf16.msra.mxu0 0
        %369 = vmatprep.subr.bf16.mxu0 0
        %370 = vmatpush1.bf16.msra.mxu0 0
        %371 = vmatprep.subr.bf16.mxu0 0
        %372 = vmatpush1.bf16.msra.mxu0 0
        %373 = vmatprep.subr.bf16.mxu0 0
        %374 = vmatpush1.bf16.msra.mxu0 0
        %375 = vmatprep.subr.bf16.mxu0 0
        %376 = vmatpush1.bf16.msra.mxu0 0
        %377 = vmatprep.subr.bf16.mxu0 0
        %378 = vmatpush1.bf16.msra.mxu0 0
        %379 = vmatprep.mubr.bf16.mxu0 0
        %380 = vmatmul.mubr.bf16.gmra.mrb[0].mxu0 %v345
        %v381 = vpop.f32.mrb[0].mxu0
        %v382 = vadd.f32 0.0, %v381
        %v383 = vpop.f32.mrb[0].mxu0
        %v384 = vpop.f32.mrb[0].mxu0
        %v385 = vadd.f32 0.0, %v384
        %v386 = vpop.f32.mrb[0].mxu0
        %387 = vdwg.mxu0
        %v388 = vpack.c.bf16 %v385, %v382
        %v389 = vpack.c.bf16 %v335, %v335
        %vm390 = vcmask 64512
        %v392 = vsel %vm390, %v388, 0
        %vm394 = vcmask 1043456
        %v396 = vsel %vm394, %v389, 0
        %398 = vmatprep.subr.bf16.mxu0 0
        %399 = vmatpush1.bf16.msra.mxu0 %v396
        %400 = vmatprep.subr.bf16.mxu0 0
        %401 = vmatpush1.bf16.msra.mxu0 0
        %402 = vmatprep.subr.bf16.mxu0 0
        %403 = vmatpush1.bf16.msra.mxu0 0
        %404 = vmatprep.subr.bf16.mxu0 0
        %405 = vmatpush1.bf16.msra.mxu0 0
        %406 = vmatprep.subr.bf16.mxu0 0
        %407 = vmatpush1.bf16.msra.mxu0 0
        %408 = vmatprep.subr.bf16.mxu0 0
        %409 = vmatpush1.bf16.msra.mxu0 0
        %410 = vmatprep.subr.bf16.mxu0 0
        %411 = vmatpush1.bf16.msra.mxu0 0
        %412 = vmatprep.subr.bf16.mxu0 0
        %413 = vmatpush1.bf16.msra.mxu0 0
        %414 = vmatprep.subr.bf16.mxu0 0
        %415 = vmatpush1.bf16.msra.mxu0 0
        %416 = vmatprep.subr.bf16.mxu0 0
        %417 = vmatpush1.bf16.msra.mxu0 0
        %418 = vmatprep.subr.bf16.mxu0 0
        %419 = vmatpush1.bf16.msra.mxu0 0
        %420 = vmatprep.subr.bf16.mxu0 0
        %421 = vmatpush1.bf16.msra.mxu0 0
        %422 = vmatprep.subr.bf16.mxu0 0
        %423 = vmatpush1.bf16.msra.mxu0 0
        %424 = vmatprep.subr.bf16.mxu0 0
        %425 = vmatpush1.bf16.msra.mxu0 0
        %426 = vmatprep.subr.bf16.mxu0 0
        %427 = vmatpush1.bf16.msra.mxu0 0
        %428 = vmatprep.subr.bf16.mxu0 0
        %429 = vmatpush1.bf16.msra.mxu0 0
        %430 = vmatprep.mubr.bf16.mxu0 0
        %431 = vmatmul.mubr.bf16.gmra.mrb[0].mxu0 %v392
        %v432 = vpop.f32.mrb[0].mxu0
        %v433 = vadd.f32 0.0, %v432
        %v434 = vpop.f32.mrb[0].mxu0
        %v435 = vpop.f32.mrb[0].mxu0
        %v436 = vadd.f32 0.0, %v435
        %v437 = vpop.f32.mrb[0].mxu0
        %438 = vdwg.mxu0
        %v440 = vlaneseq
        %v441 = vshrl.u32 %v440, 7
        %v442 = vsub.s32 0, %v441
        %v443 = vrot.slane %v336, %v442
        %v445 = vadd.f32 %v433, %v443
        %v446 = vadd.f32 %v436, %v443
        %v447 = vmax.f32 %v445, 0.0
        %v448 = vmax.f32 %v446, 0.0
        %v449 = vpack.c.bf16 %v448, %v447
        %v450 = vmul.bf16 %v449, %v327
        %v451 = vpack.c.bf16 %v333, %v332
        %v453 = vsel %vm343, %v450, 0
        %455 = vmatprep.subr.bf16.mxu0 0
        %456 = vmatpush1.bf16.msra.mxu0 %v451
        %457 = vmatprep.subr.bf16.mxu0 0
        %458 = vmatpush1.bf16.msra.mxu0 0
        %459 = vmatprep.subr.bf16.mxu0 0
        %460 = vmatpush1.bf16.msra.mxu0 0
        %461 = vmatprep.subr.bf16.mxu0 0
        %462 = vmatpush1.bf16.msra.mxu0 0
        %463 = vmatprep.subr.bf16.mxu0 0
        %464 = vmatpush1.bf16.msra.mxu0 0
        %465 = vmatprep.subr.bf16.mxu0 0
        %466 = vmatpush1.bf16.msra.mxu0 0
        %467 = vmatprep.subr.bf16.mxu0 0
        %468 = vmatpush1.bf16.msra.mxu0 0
        %469 = vmatprep.subr.bf16.mxu0 0
        %470 = vmatpush1.bf16.msra.mxu0 0
        %471 = vmatprep.subr.bf16.mxu0 0
        %472 = vmatpush1.bf16.msra.mxu0 0
        %473 = vmatprep.subr.bf16.mxu0 0
        %474 = vmatpush1.bf16.msra.mxu0 0
        %475 = vmatprep.subr.bf16.mxu0 0
        %476 = vmatpush1.bf16.msra.mxu0 0
        %477 = vmatprep.subr.bf16.mxu0 0
        %478 = vmatpush1.bf16.msra.mxu0 0
        %479 = vmatprep.subr.bf16.mxu0 0
        %480 = vmatpush1.bf16.msra.mxu0 0
        %481 = vmatprep.subr.bf16.mxu0 0
        %482 = vmatpush1.bf16.msra.mxu0 0
        %483 = vmatprep.subr.bf16.mxu0 0
        %484 = vmatpush1.bf16.msra.mxu0 0
        %485 = vmatprep.subr.bf16.mxu0 0
        %486 = vmatpush1.bf16.msra.mxu0 0
        %487 = vmatprep.mubr.bf16.mxu0 0
        %488 = vmatmul.mubr.bf16.gmra.mrb[0].mxu0 %v453
        %v489 = vpop.f32.mrb[0].mxu0
        %v490 = vadd.f32 0.0, %v489
        %v491 = vpop.f32.mrb[0].mxu0
        %v492 = vpop.f32.mrb[0].mxu0
        %v493 = vadd.f32 0.0, %v492
        %v494 = vpop.f32.mrb[0].mxu0
        %495 = vdwg.mxu0
        %v496 = vpack.c.bf16 %v493, %v490
        %v498 = vlaneseq
        %v499 = vshrl.u32 %v498, 7
        %v500 = vsub.s32 0, %v499
        %v501 = vrot.slane %v334, %v500
        %503 = vmatprep.subr.bf16.mxu0 0
        %504 = vmatpush1.bf16.msra.mxu0 %v496
        %505 = vmatprep.subr.bf16.mxu0 0
        %506 = vmatpush1.bf16.msra.mxu0 0
        %507 = vmatprep.subr.bf16.mxu0 0
        %508 = vmatpush1.bf16.msra.mxu0 0
        %509 = vmatprep.subr.bf16.mxu0 0
        %510 = vmatpush1.bf16.msra.mxu0 0
        %511 = vmatprep.subr.bf16.mxu0 0
        %512 = vmatpush1.bf16.msra.mxu0 0
        %513 = vmatprep.subr.bf16.mxu0 0
        %514 = vmatpush1.bf16.msra.mxu0 0
        %515 = vmatprep.subr.bf16.mxu0 0
        %516 = vmatpush1.bf16.msra.mxu0 0
        %517 = vmatprep.subr.bf16.mxu0 0
        %518 = vmatpush1.bf16.msra.mxu0 0
        %519 = vmatprep.subr.bf16.mxu0 0
        %520 = vmatpush1.bf16.msra.mxu0 0
        %521 = vmatprep.subr.bf16.mxu0 0
        %522 = vmatpush1.bf16.msra.mxu0 0
        %523 = vmatprep.subr.bf16.mxu0 0
        %524 = vmatpush1.bf16.msra.mxu0 0
        %525 = vmatprep.subr.bf16.mxu0 0
        %526 = vmatpush1.bf16.msra.mxu0 0
        %527 = vmatprep.subr.bf16.mxu0 0
        %528 = vmatpush1.bf16.msra.mxu0 0
        %529 = vmatprep.subr.bf16.mxu0 0
        %530 = vmatpush1.bf16.msra.mxu0 0
        %531 = vmatprep.subr.bf16.mxu0 0
        %532 = vmatpush1.bf16.msra.mxu0 0
        %533 = vmatprep.subr.bf16.mxu0 0
        %534 = vmatpush1.bf16.msra.mxu0 0
        %535 = vmatprep.mubr.bf16.mxu0 0
        %536 = vmatmul.mubr.bf16.gmra.mrb[0].mxu0 %v345
        %v537 = vpop.f32.mrb[0].mxu0
        %v538 = vadd.f32 %v501, %v537
        %v539 = vpop.f32.mrb[0].mxu0
        %v540 = vpop.f32.mrb[0].mxu0
        %v541 = vadd.f32 %v501, %v540
        %v542 = vpop.f32.mrb[0].mxu0
        %543 = vdwg.mxu0
        %v544 = vmax.f32 %v538, 0.0
        %v545 = vmax.f32 %v541, 0.0
        %v546 = vpack.c.bf16 %v545, %v544
        %v547 = vmul.bf16 %v546, %v327
        %vm548 = vcmask 195712
        %v549 = vsel %vm548, %v445, -inf
        %550 = vmax.xlane.f32.xlu0 %v549
        %v551 = vpop.xlane.xlu0 %550
        %v552 = vsel %vm548, %v446, -inf
        %553 = vmax.xlane.f32.xlu0 %v552
        %v554 = vpop.xlane.xlu0 %553
        %v555 = vsub.f32 %v445, %v551
        %v556 = vsub.f32 %v446, %v554
        %v557 = vmul.f32 %v555, 1.442695
        %v558 = vpow.pop %v557
        %v559 = vmul.f32 %v556, 1.442695
        %v560 = vpow.pop %v559
        %563 = vrot.lane.b32.xlu0 %v558, 112
        %v564 = vpop.permute.xlu0 %563
        %565 = vrot.lane.b32.xlu0 %v560, 112
        %v566 = vpop.permute.xlu0 %565
        %v569 = vsel %vm390, %v564, 0.0
        %570 = vadd.xlane.f32.xlu0 %v569
        %v571 = vpop.xlane.xlu0 %570
        %v572 = vsel %vm390, %v566, 0.0
        %573 = vadd.xlane.f32.xlu0 %v572
        %v574 = vpop.xlane.xlu0 %573
        %v575 = vrcp.pop %v571
        %v576 = vmul.f32 %v558, %v575
        %v577 = vrcp.pop %v574
        %v578 = vmul.f32 %v560, %v577
        %v579 = vpack.c.bf16 %v578, %v576
        %v580 = vmul.bf16 %v579, %v327
        %582 = vrot.lane.b32.xlu0 %v580, 112
        %v583 = vpop.permute.xlu0 %582
        %585 = vxpose.xlu0.c.b16.start [1/8] %v583, 128
        %586 = vxpose.xlu0.c.b16.cont [2/8] 0, 128
        %587 = vxpose.xlu0.c.b16.cont [3/8] 0, 128
        %588 = vxpose.xlu0.c.b16.cont [4/8] 0, 128
        %589 = vxpose.xlu0.c.b16.cont [5/8] 0, 128
        %590 = vxpose.xlu0.c.b16.cont [6/8] 0, 128
        %591 = vxpose.xlu0.c.b16.cont [7/8] 0, 128
        %592 = vxpose.xlu0.c.b16.end [8/8] 0, 128
        %v593 = vpop.trf.xlu0
        %v594 = vpop.trf.xlu0
        %v595 = vpop.trf.xlu0
        %v596 = vpop.trf.xlu0
        %v597 = vpop.trf.xlu0
        %v598 = vpop.trf.xlu0
        %v599 = vpop.trf.xlu0
        %v600 = vpop.trf.xlu0
        %v602 = vsel %vm343, %v593, 0
        %604 = vmatprep.subr.bf16.mxu0 0
        %605 = vmatpush1.bf16.msra.mxu0 %v547
        %606 = vmatprep.subr.bf16.mxu0 0
        %607 = vmatpush1.bf16.msra.mxu0 0
        %608 = vmatprep.subr.bf16.mxu0 0
        %609 = vmatpush1.bf16.msra.mxu0 0
        %610 = vmatprep.subr.bf16.mxu0 0
        %611 = vmatpush1.bf16.msra.mxu0 0
        %612 = vmatprep.subr.bf16.mxu0 0
        %613 = vmatpush1.bf16.msra.mxu0 0
        %614 = vmatprep.subr.bf16.mxu0 0
        %615 = vmatpush1.bf16.msra.mxu0 0
        %616 = vmatprep.subr.bf16.mxu0 0
        %617 = vmatpush1.bf16.msra.mxu0 0
        %618 = vmatprep.subr.bf16.mxu0 0
        %619 = vmatpush1.bf16.msra.mxu0 0
        %620 = vmatprep.subr.bf16.mxu0 0
        %621 = vmatpush1.bf16.msra.mxu0 0
        %622 = vmatprep.subr.bf16.mxu0 0
        %623 = vmatpush1.bf16.msra.mxu0 0
        %624 = vmatprep.subr.bf16.mxu0 0
        %625 = vmatpush1.bf16.msra.mxu0 0
        %626 = vmatprep.subr.bf16.mxu0 0
        %627 = vmatpush1.bf16.msra.mxu0 0
        %628 = vmatprep.subr.bf16.mxu0 0
        %629 = vmatpush1.bf16.msra.mxu0 0
        %630 = vmatprep.subr.bf16.mxu0 0
        %631 = vmatpush1.bf16.msra.mxu0 0
        %632 = vmatprep.subr.bf16.mxu0 0
        %633 = vmatpush1.bf16.msra.mxu0 0
        %634 = vmatprep.subr.bf16.mxu0 0
        %635 = vmatpush1.bf16.msra.mxu0 0
        %636 = vmatprep.mubr.bf16.mxu0 0
        %637 = vmatmul.mubr.bf16.gmra.mrb[0].mxu0 %v602
        %v638 = vpop.f32.mrb[0].mxu0
        %v639 = vadd.f32 0.0, %v638
        %v640 = vpop.f32.mrb[0].mxu0
        %v641 = vpop.f32.mrb[0].mxu0
        %v642 = vpop.f32.mrb[0].mxu0
        %643 = vdwg.mxu0
        %645 = vmatprep.subr.bf16.mxu0 0
        %646 = vmatpush1.bf16.msra.mxu0 %v342
        %647 = vmatprep.subr.bf16.mxu0 0
        %648 = vmatpush1.bf16.msra.mxu0 0
        %649 = vmatprep.subr.bf16.mxu0 0
        %650 = vmatpush1.bf16.msra.mxu0 0
        %651 = vmatprep.subr.bf16.mxu0 0
        %652 = vmatpush1.bf16.msra.mxu0 0
        %653 = vmatprep.subr.bf16.mxu0 0
        %654 = vmatpush1.bf16.msra.mxu0 0
        %655 = vmatprep.subr.bf16.mxu0 0
        %656 = vmatpush1.bf16.msra.mxu0 0
        %657 = vmatprep.subr.bf16.mxu0 0
        %658 = vmatpush1.bf16.msra.mxu0 0
        %659 = vmatprep.subr.bf16.mxu0 0
        %660 = vmatpush1.bf16.msra.mxu0 0
        %661 = vmatprep.subr.bf16.mxu0 0
        %662 = vmatpush1.bf16.msra.mxu0 0
        %663 = vmatprep.subr.bf16.mxu0 0
        %664 = vmatpush1.bf16.msra.mxu0 0
        %665 = vmatprep.subr.bf16.mxu0 0
        %666 = vmatpush1.bf16.msra.mxu0 0
        %667 = vmatprep.subr.bf16.mxu0 0
        %668 = vmatpush1.bf16.msra.mxu0 0
        %669 = vmatprep.subr.bf16.mxu0 0
        %670 = vmatpush1.bf16.msra.mxu0 0
        %671 = vmatprep.subr.bf16.mxu0 0
        %672 = vmatpush1.bf16.msra.mxu0 0
        %673 = vmatprep.subr.bf16.mxu0 0
        %674 = vmatpush1.bf16.msra.mxu0 0
        %675 = vmatprep.subr.bf16.mxu0 0
        %676 = vmatpush1.bf16.msra.mxu0 0
        %677 = vmatprep.mubr.bf16.mxu0 0
        %678 = vmatmul.mubr.bf16.gmra.mrb[0].mxu0 %v602
        %v679 = vpop.f32.mrb[0].mxu0
        %v680 = vadd.f32 0.0, %v679
        %v681 = vpop.f32.mrb[0].mxu0
        %v682 = vpop.f32.mrb[0].mxu0
        %v683 = vpop.f32.mrb[0].mxu0
        %684 = vdwg.mxu0
        %v685 = vpack.c.bf16 %v680, %v680
        %v687 = vsel %vm343, %v685, 0
        %689 = vmatprep.subr.bf16.mxu0 0
        %690 = vmatpush1.bf16.msra.mxu0 %v583
        %691 = vmatprep.subr.bf16.mxu0 0
        %692 = vmatpush1.bf16.msra.mxu0 0
        %693 = vmatprep.subr.bf16.mxu0 0
        %694 = vmatpush1.bf16.msra.mxu0 0
        %695 = vmatprep.subr.bf16.mxu0 0
        %696 = vmatpush1.bf16.msra.mxu0 0
        %697 = vmatprep.subr.bf16.mxu0 0
        %698 = vmatpush1.bf16.msra.mxu0 0
        %699 = vmatprep.subr.bf16.mxu0 0
        %700 = vmatpush1.bf16.msra.mxu0 0
        %701 = vmatprep.subr.bf16.mxu0 0
        %702 = vmatpush1.bf16.msra.mxu0 0
        %703 = vmatprep.subr.bf16.mxu0 0
        %704 = vmatpush1.bf16.msra.mxu0 0
        %705 = vmatprep.subr.bf16.mxu0 0
        %706 = vmatpush1.bf16.msra.mxu0 0
        %707 = vmatprep.subr.bf16.mxu0 0
        %708 = vmatpush1.bf16.msra.mxu0 0
        %709 = vmatprep.subr.bf16.mxu0 0
        %710 = vmatpush1.bf16.msra.mxu0 0
        %711 = vmatprep.subr.bf16.mxu0 0
        %712 = vmatpush1.bf16.msra.mxu0 0
        %713 = vmatprep.subr.bf16.mxu0 0
        %714 = vmatpush1.bf16.msra.mxu0 0
        %715 = vmatprep.subr.bf16.mxu0 0
        %716 = vmatpush1.bf16.msra.mxu0 0
        %717 = vmatprep.subr.bf16.mxu0 0
        %718 = vmatpush1.bf16.msra.mxu0 0
        %719 = vmatprep.subr.bf16.mxu0 0
        %720 = vmatpush1.bf16.msra.mxu0 0
        %721 = vmatprep.mubr.bf16.mxu0 0
        %722 = vmatmul.mubr.bf16.gmra.mrb[0].mxu0 %v687
        %v723 = vpop.f32.mrb[0].mxu0
        %v724 = vadd.f32 0.0, %v723
        %v725 = vpop.f32.mrb[0].mxu0
        %v726 = vpop.f32.mrb[0].mxu0
        %v727 = vpop.f32.mrb[0].mxu0
        %728 = vdwg.mxu0
        %v729 = vpack.c.bf16 %v639, %v639
        %v730 = vpack.c.bf16 %v724, %v724
        %vm731 = vcmask 125952
        %732 = vst.msk [vmem:[%s297] sm:$0xf] %vm731, %v729
        %vm733 = vcmask 60416
        %734 = vst.msk [vmem:[%s304] sm:$0xf] %vm733, %v730
        %s735 = sand.u32 %s176, 1
        %s736 = scalar_lea.sflag [#allocation5], %s735
        %s737 = sand.u32 %s176, 1
        %s738 = smul.addr %s737, 4
        %s739 = scalar_lea.vmem [#allocation4], %s738
        %s740 = sand.u32 %s202, 1
        %s741 = scalar_lea.sflag [#allocation7], %s740
        %s742 = sand.u32 %s202, 1
        %s743 = smul.addr %s742, 4
        %s744 = scalar_lea.vmem [#allocation6], %s743
        // Predicated region
        $region45: #{tpu_custom_call.1} parent=43 // pred_check
          %p745 = pneg %p186
        $region46: #{tpu_custom_call.1} parent=43 // pred_check_branch
          %747 = sbr.rel (%p745) target = $region48
        $region47: #{tpu_custom_call.1} parent=43 // pred_region
          %s749 = ssub.s32 64, 64
          %750 = vsyncadd %s736, %s749
          %s751 = smul.addr %s32, 64
          %s752 = scalar_lea.hbm %s7, %s751
          %s754 = sshll.u32 %s739, 4
          %s755 = int_to_ptr.vmem [resolvable:$true] %s754
          %757 = dma.vmem_to_hbm [thread:$0]  %s755, 64, %s752, %s736
        $region48: #{tpu_custom_call.1} parent=43 // pred_fallthru
          _
        // Predicated region
        $region49: #{tpu_custom_call.1} parent=43 // pred_check
          %p758 = pneg %p212
        $region50: #{tpu_custom_call.1} parent=43 // pred_check_branch
          %760 = sbr.rel (%p758) target = $region52
        $region51: #{tpu_custom_call.1} parent=43 // pred_region
          %s762 = ssub.s32 64, 64
          %763 = vsyncadd %s741, %s762
          %s764 = smul.addr %s32, 64
          %s765 = scalar_lea.hbm %s8, %s764
          %s767 = sshll.u32 %s744, 4
          %s768 = int_to_ptr.vmem [resolvable:$true] %s767
          %770 = dma.vmem_to_hbm [thread:$0]  %s768, 64, %s765, %s741
        $region52: #{tpu_custom_call.1} parent=43 // pred_fallthru
          _
      $region44: #{tpu_custom_call.1} parent=5 // pred_fallthru
        _
      %p771 = scmp.le.s32.totalorder 2, %s27
      // Predicated region
      $region53: #{tpu_custom_call.1} parent=5 // pred_check
        %p772 = pneg %p771
      $region54: #{tpu_custom_call.1} parent=5 // pred_check_branch
        %774 = sbr.rel (%p772) target = $region56
      $region55: #{tpu_custom_call.1} parent=5 // pred_region
        %s775 = ssub.s32 %s27, 2
        // Predicated region
        $region57: #{tpu_custom_call.1} parent=55 // pred_check
          %p776 = pneg %p192
        $region58: #{tpu_custom_call.1} parent=55 // pred_check_branch
          %778 = sbr.rel (%p776) target = $region60
        $region59: #{tpu_custom_call.1} parent=55 // pred_region
          %s779 = sand.u32 %s177, 1
          %s780 = scalar_lea.sflag [#allocation5], %s779
          %s781 = sand.u32 %s177, 1
          %s782 = smul.addr %s781, 4
          %s783 = scalar_lea.vmem [#allocation4], %s782
          %784 = dma.done %s780, 64
        $region60: #{tpu_custom_call.1} parent=55 // pred_fallthru
          _
        // Predicated region
        $region61: #{tpu_custom_call.1} parent=55 // pred_check
          %p785 = pneg %p218
        $region62: #{tpu_custom_call.1} parent=55 // pred_check_branch
          %787 = sbr.rel (%p785) target = $region64
        $region63: #{tpu_custom_call.1} parent=55 // pred_region
          %s788 = sand.u32 %s203, 1
          %s789 = scalar_lea.sflag [#allocation7], %s788
          %s790 = sand.u32 %s203, 1
          %s791 = smul.addr %s790, 4
          %s792 = scalar_lea.vmem [#allocation6], %s791
          %793 = dma.done %s789, 64
        $region64: #{tpu_custom_call.1} parent=55 // pred_fallthru
          _
      $region56: #{tpu_custom_call.1} parent=5 // pred_fallthru
        _
    $region6: #{tpu_custom_call.1} parent=1 // loop_footer
      %s31 = sadd.s32 1, %s27
    $region7: #{tpu_custom_call.1} parent=1 // loop_footer_branch
      %26 = sbr.rel target = $region3
    $region8: #{tpu_custom_call.1} parent=1 // loop_exit
      _
    %794 = vsyncpa [#allocation5], 1
    %s795 = scalar_lea.sflag [#allocation5], 1
    %796 = vsyncpa %s795, 1
    %797 = vsyncpa [#allocation7], 1
    %s798 = scalar_lea.sflag [#allocation7], 1
    %799 = vsyncpa %s798, 1

</llo_original>
